<compile_context>
chip_gen: v6e
topology: v6e:2x2x1
jax: 0.10.0
libtpu: 0.0.40
codegen_flags: <defaults>
</compile_context>

<pallas_src>
import functools

import jax
import jax.numpy as jnp
from jax.experimental import pallas as pl
from jax.experimental.pallas import tpu as pltpu


def lstm_kernel(x_ref, w_ih_ref, b_ref, w_hh_ref, w_out_ref, b_out_ref,
                y_ref, h_scr, c_scr, pre_scr):
    """One (batch-chunk, time-chunk) grid step of the LSTM recurrence.

    x_ref:     (T_CHUNK, B_CHUNK, E)   bf16  streamed, double-buffered
    w_ih_ref:  (E, 4H)                 bf16  resident (constant block index)
    b_ref:     (1, 4H)                 f32   resident (b_ih + b_hh folded)
    w_hh_ref:  (H, 4H)                 bf16  resident
    w_out_ref: (1, H)                  f32   resident (final linear, transposed)
    b_out_ref: (1, 1)                  f32   SMEM scalar
    y_ref:     (1, B_CHUNK)            f32   sigmoid(linear(h_T)), lane-dense
    h_scr/c_scr: (B_CHUNK, H)          f32   persistent recurrent state
    pre_scr:   (T_CHUNK, B_CHUNK, 4H)  f32   per-chunk pre-activations
    """
    t_id = pl.program_id(1)
    n_t = pl.num_programs(1)

    T, Bc, E = x_ref.shape
    H = w_hh_ref.shape[0]

    @pl.when(t_id == 0)
    def _init():
        h_scr[...] = jnp.zeros_like(h_scr)
        c_scr[...] = jnp.zeros_like(c_scr)

    # Fused input projection for the whole chunk: one wide MXU matmul
    # (T*Bc rows) that sits off the serial path of the recurrence.
    x_chunk = x_ref[...].reshape(T * Bc, E)                       # bf16
    pre = jnp.dot(x_chunk, w_ih_ref[...],
                  preferred_element_type=jnp.float32) + b_ref[...]
    pre_scr[...] = pre.reshape(T, Bc, 4 * H)

    w_hh = w_hh_ref[...]                                          # bf16, hoisted

    def step(t, carry):
        h, c = carry
        # Only this small (Bc, H) @ (H, 4H) matmul is serialized over time.
        gates = pre_scr[t] + jnp.dot(h.astype(jnp.bfloat16), w_hh,
                                     preferred_element_type=jnp.float32)
        # Gate order is (i, f, o, g): one sigmoid pass over 3H lanes,
        # one tanh over the remaining H lanes.
        sig = jax.nn.sigmoid(gates[:, :3 * H])
        i_g = sig[:, 0 * H:1 * H]
        f_g = sig[:, 1 * H:2 * H]
        o_g = sig[:, 2 * H:3 * H]
        g_g = jnp.tanh(gates[:, 3 * H:4 * H])
        c_new = f_g * c + i_g * g_g
        h_new = o_g * jnp.tanh(c_new)
        return (h_new, c_new)

    # Bounded unroll: only over the chunk, never the full sequence.
    h_t, c_t = jax.lax.fori_loop(0, T, step, (h_scr[...], c_scr[...]),
                                 unroll=True)
    h_scr[...] = h_t
    c_scr[...] = c_t

    @pl.when(t_id == n_t - 1)
    def _head():
        # Output head, once per batch chunk: (1, H) x (Bc, H)^T -> (1, Bc),
        # emitted as a single lane-dense store.
        y = jax.lax.dot_general(w_out_ref[...], h_t,
                                (((1,), (1,)), ((), ())),
                                preferred_element_type=jnp.float32)
        y_ref[...] = jax.nn.sigmoid(y + b_out_ref[0, 0])


def prepare_kernel_params(params):
    """One-time offline prep of kernel operands.

    Permutes gate columns (i, f, g, o) -> (i, f, o, g), casts the MXU-resident
    weights to bf16, and transposes the output-head weight to (1, H).
    """
    H = params["w_hh"].shape[0]
    perm = jnp.concatenate([jnp.arange(0, 2 * H),        # i, f
                            jnp.arange(3 * H, 4 * H),    # o
                            jnp.arange(2 * H, 3 * H)])   # g
    return {
        "embedding": params["embedding"],
        "w_ih": params["w_ih"][:, perm].astype(jnp.bfloat16),
        "w_hh": params["w_hh"][:, perm].astype(jnp.bfloat16),
        "b": params["b"][:, perm],
        "w_out_t": params["w_out"].T,                    # (1, H)
        "b_out": params["b_out"],                        # (1, 1)
    }


@functools.partial(jax.jit, static_argnames=("t_chunk", "b_chunk"))
def lstmc_forward(token_ids, kparams, *, t_chunk=4, b_chunk=None):
    """Equivalent of LSTMC.forward (eval mode) for token_ids of shape (S, B)."""
    # Embedding lookup (plain JAX gather). Dropout -> identity (eval mode).
    x = jnp.take(kparams["embedding"], token_ids, axis=0)        # (S, B, E)
    S, B, E = x.shape
    H = kparams["w_hh"].shape[0]

    b_chunk = B if b_chunk is None else b_chunk
    t_chunk = min(t_chunk, S)
    assert S % t_chunk == 0, "pad the sequence so S % t_chunk == 0"
    assert B % b_chunk == 0 and (b_chunk == B or b_chunk % 128 == 0), (
        "b_chunk must tile B and respect the (8,128) layout rule")
    n_b = B // b_chunk
    n_t = S // t_chunk

    # bf16 token stream: halves HBM traffic; the MXU operands are bf16 anyway.
    x_bf16 = x.astype(jnp.bfloat16)

    y = pl.pallas_call(
        lstm_kernel,
        out_shape=jax.ShapeDtypeStruct((1, B), jnp.float32),
        grid_spec=pltpu.PrefetchScalarGridSpec(
            num_scalar_prefetch=0,
            grid=(n_b, n_t),
            in_specs=[
                # Streamed token chunks; double-buffered so the DMA of chunk
                # t+1 hides behind the recurrent matmuls of chunk t.
                pl.BlockSpec((t_chunk, b_chunk, E), lambda b, t: (t, b, 0),
                             pipeline_mode=pl.Buffered(2)),
                # Weights: constant block index -> loaded once, stay resident.
                pl.BlockSpec((E, 4 * H), lambda b, t: (0, 0)),
                pl.BlockSpec((1, 4 * H), lambda b, t: (0, 0)),
                pl.BlockSpec((H, 4 * H), lambda b, t: (0, 0)),
                pl.BlockSpec((1, H), lambda b, t: (0, 0)),
                pl.BlockSpec(memory_space=pltpu.MemorySpace.SMEM),   # b_out
            ],
            out_specs=pl.BlockSpec((1, b_chunk), lambda b, t: (0, b)),
            scratch_shapes=[
                pltpu.VMEM((b_chunk, H), jnp.float32),               # h
                pltpu.VMEM((b_chunk, H), jnp.float32),               # c
                pltpu.VMEM((t_chunk, b_chunk, 4 * H), jnp.float32),  # pre
            ],
        ),
        compiler_params=pltpu.CompilerParams(
            dimension_semantics=("parallel", "arbitrary"),
            # Explicit scoped-VMEM budget: safe on v7x's 64 MiB physical VMEM.
            vmem_limit_bytes=32 * 1024 * 1024,
        ),
    )(x_bf16, kparams["w_ih"], kparams["b"], kparams["w_hh"],
      kparams["w_out_t"], kparams["b_out"])

    return y[0]                 # (B,)  matches .squeeze()


def lstmc_reference(token_ids, params):
    """Pure-JAX reference (lax.scan) mirroring PyTorch LSTMCell semantics."""
    x = jnp.take(params["embedding"], token_ids, axis=0)         # (S, B, E)
    H = params["w_hh"].shape[0]

    def step(carry, x_t):
        h, c = carry
        gates = x_t @ params["w_ih"] + h @ params["w_hh"] + params["b"]
        i_g = jax.nn.sigmoid(gates[:, 0 * H:1 * H])
        f_g = jax.nn.sigmoid(gates[:, 1 * H:2 * H])
        g_g = jnp.tanh(gates[:, 2 * H:3 * H])
        o_g = jax.nn.sigmoid(gates[:, 3 * H:4 * H])
        c_new = f_g * c + i_g * g_g
        h_new = o_g * jnp.tanh(c_new)
        return (h_new, c_new), h_new

    B = x.shape[1]
    h0 = jnp.zeros((B, H), jnp.float32)
    c0 = jnp.zeros((B, H), jnp.float32)
    (h_T, _), _ = jax.lax.scan(step, (h0, c0), x)
    y = h_T @ params["w_out"] + params["b_out"]
    return jnp.squeeze(jax.nn.sigmoid(y), axis=-1)


def init_params(key, vocab_size, embedding_dim, hidden_dim):
    ks = jax.random.split(key, 7)
    s = 1.0 / jnp.sqrt(hidden_dim)
    return {
        # nn.Embedding(vocab_size + 1, embedding_dim)
        "embedding": jax.random.normal(
            ks[0], (vocab_size + 1, embedding_dim), jnp.float32),
        # LSTMCell weights, PyTorch gate order (i, f, g, o), stored transposed
        # relative to PyTorch so the math is x @ W.
        "w_ih": jax.random.uniform(
            ks[1], (embedding_dim, 4 * hidden_dim), jnp.float32, -s, s),
        "w_hh": jax.random.uniform(
            ks[2], (hidden_dim, 4 * hidden_dim), jnp.float32, -s, s),
        # b = b_ih + b_hh folded together, kept 2-D for TPU layout.
        "b": jax.random.uniform(
            ks[3], (1, 4 * hidden_dim), jnp.float32, -s, s),
        # nn.Linear(hidden_dim, 1)
        "w_out": jax.random.uniform(
            ks[4], (hidden_dim, 1), jnp.float32, -s, s),
        "b_out": jax.random.uniform(
            ks[5], (1, 1), jnp.float32, -s, s),
    }


if __name__ == "__main__":
    vocab_size = 50
    embedding_dim = 32
    hidden_dim = 32
    seq_len = 8
    batch = 8

    key = jax.random.PRNGKey(0)
    k_param, k_tok = jax.random.split(key)
    params = init_params(k_param, vocab_size, embedding_dim, hidden_dim)
    kparams = prepare_kernel_params(params)        # offline weight prep

    # token ids, shape (seq_len, batch) — batch_first=False convention.
    token_ids = jax.random.randint(
        k_tok, (seq_len, batch), 0, vocab_size + 1, dtype=jnp.int32)

    out = lstmc_forward(token_ids, kparams, t_chunk=4)
    out = jax.block_until_ready(out)

    ref = lstmc_reference(token_ids, params)
    assert out.shape == (batch,)
    # bf16 MXU operands -> looser tolerance vs. the fp32 reference.
    assert jnp.allclose(out, ref, atol=2e-2, rtol=2e-2), (out, ref)

    print("KERNEL_OK")
</pallas_src>

<mosaic_0001>
module attributes {stable_mosaic.version = 11 : i64} {
  func.func @lstm_kernel(%arg0: i32, %arg1: i32, %arg2: memref<4x8x32xbf16, #tpu.memory_space<vmem>>, %arg3: memref<32x128xbf16, #tpu.memory_space<vmem>>, %arg4: memref<1x128xf32, #tpu.memory_space<vmem>>, %arg5: memref<32x128xbf16, #tpu.memory_space<vmem>>, %arg6: memref<1x32xf32, #tpu.memory_space<vmem>>, %arg7: memref<1x1xf32, #tpu.memory_space<smem>>, %arg8: memref<1x8xf32, #tpu.memory_space<vmem>>, %arg9: memref<8x32xf32, #tpu.memory_space<vmem>>, %arg10: memref<8x32xf32, #tpu.memory_space<vmem>>, %arg11: memref<4x8x128xf32, #tpu.memory_space<vmem>>) attributes {dimension_semantics = [#tpu.dimension_semantics<parallel>, #tpu.dimension_semantics<arbitrary>], iteration_bounds = array<i64: 1, 2>, scalar_prefetch = 0 : i64, scratch_operands = 3 : i64, tpu.core_type = #tpu.core_type<tc>, window_params = [{pipeline_mode = #tpu.pipeline_mode<double_buffered>, transform_indices = @transform_0, window_bounds = array<i64: 4, 8, 32>}, {pipeline_mode = #tpu.pipeline_mode<synchronous>, transform_indices = @transform_1, window_bounds = array<i64: 32, 128>}, {pipeline_mode = #tpu.pipeline_mode<synchronous>, transform_indices = @transform_2, window_bounds = array<i64: 1, 128>}, {pipeline_mode = #tpu.pipeline_mode<synchronous>, transform_indices = @transform_3, window_bounds = array<i64: 32, 128>}, {pipeline_mode = #tpu.pipeline_mode<synchronous>, transform_indices = @transform_4, window_bounds = array<i64: 1, 32>}, {transform_indices = @transform_5, window_bounds = array<i64: 1, 1>}, {transform_indices = @transform_6, window_bounds = array<i64: 1, 8>}]} {
    %c0_i32 = arith.constant 0 : i32
    %0 = arith.cmpi eq, %arg1, %c0_i32 : i32
    %1 = arith.extui %0 : i1 to i32
    %c0_i32_0 = arith.constant 0 : i32
    %2 = arith.cmpi ne, %1, %c0_i32_0 : i32
    scf.if %2 {
      %cst_39 = arith.constant 0.000000e+00 : f32
      %108 = vector.broadcast %cst_39 : f32 to vector<8x32xf32>
      %c0_40 = arith.constant 0 : index
      %c0_41 = arith.constant 0 : index
      %109 = vector.load %arg9[%c0_40, %c0_41] : memref<8x32xf32, #tpu.memory_space<vmem>>, vector<8x32xf32>
      tpu.vector_store %arg9[%c0_40, %c0_41], %108 {strides = array<i32>} : memref<8x32xf32, #tpu.memory_space<vmem>>, vector<8x32xf32>,
      %cst_42 = arith.constant 0.000000e+00 : f32
      %110 = vector.broadcast %cst_42 : f32 to vector<8x32xf32>
      %c0_43 = arith.constant 0 : index
      %c0_44 = arith.constant 0 : index
      %111 = vector.load %arg10[%c0_43, %c0_44] : memref<8x32xf32, #tpu.memory_space<vmem>>, vector<8x32xf32>
      tpu.vector_store %arg10[%c0_43, %c0_44], %110 {strides = array<i32>} : memref<8x32xf32, #tpu.memory_space<vmem>>, vector<8x32xf32>,
    } else {
    }
    %c0 = arith.constant 0 : index
    %c0_1 = arith.constant 0 : index
    %c0_2 = arith.constant 0 : index
    %3 = vector.load %arg2[%c0, %c0_1, %c0_2] : memref<4x8x32xbf16, #tpu.memory_space<vmem>>, vector<4x8x32xbf16>
    %4 = vector.shape_cast %3 : vector<4x8x32xbf16> to vector<32x32xbf16>
    %c0_3 = arith.constant 0 : index
    %c0_4 = arith.constant 0 : index
    %5 = vector.load %arg3[%c0_3, %c0_4] : memref<32x128xbf16, #tpu.memory_space<vmem>>, vector<32x128xbf16>
    %cst = arith.constant dense<0.000000e+00> : vector<32x128xf32>
    %6 = tpu.matmul %4, %5, %cst {dimension_numbers = #tpu.dot_dimension_numbers<[1], [0], [0], [1], [0, 0, 1, 1], [], []>} : vector<32x32xbf16>, vector<32x128xbf16>, vector<32x128xf32> -> vector<32x128xf32>
    %c0_5 = arith.constant 0 : index
    %c0_6 = arith.constant 0 : index
    %7 = vector.load %arg4[%c0_5, %c0_6] : memref<1x128xf32, #tpu.memory_space<vmem>>, vector<1x128xf32>
    %8 = vector.broadcast %7 : vector<1x128xf32> to vector<32x128xf32>
    %9 = arith.addf %6, %8 : vector<32x128xf32>
    %10 = vector.shape_cast %9 : vector<32x128xf32> to vector<4x8x128xf32>
    %c0_7 = arith.constant 0 : index
    %c0_8 = arith.constant 0 : index
    %c0_9 = arith.constant 0 : index
    %11 = vector.load %arg11[%c0_7, %c0_8, %c0_9] : memref<4x8x128xf32, #tpu.memory_space<vmem>>, vector<4x8x128xf32>
    tpu.vector_store %arg11[%c0_7, %c0_8, %c0_9], %10 {strides = array<i32>} : memref<4x8x128xf32, #tpu.memory_space<vmem>>, vector<4x8x128xf32>,
    %c0_10 = arith.constant 0 : index
    %c0_11 = arith.constant 0 : index
    %12 = vector.load %arg5[%c0_10, %c0_11] : memref<32x128xbf16, #tpu.memory_space<vmem>>, vector<32x128xbf16>
    %c0_12 = arith.constant 0 : index
    %c0_13 = arith.constant 0 : index
    %13 = vector.load %arg9[%c0_12, %c0_13] : memref<8x32xf32, #tpu.memory_space<vmem>>, vector<8x32xf32>
    %c0_14 = arith.constant 0 : index
    %c0_15 = arith.constant 0 : index
    %14 = vector.load %arg10[%c0_14, %c0_15] : memref<8x32xf32, #tpu.memory_space<vmem>>, vector<8x32xf32>
    %c0_i32_16 = arith.constant 0 : i32
    %15 = arith.index_cast %c0_i32_16 : i32 to index
    %c0_17 = arith.constant 0 : index
    %c0_18 = arith.constant 0 : index
    %16 = vector.load %arg11[%15, %c0_17, %c0_18] : memref<4x8x128xf32, #tpu.memory_space<vmem>>, vector<1x8x128xf32>
    %17 = vector.shape_cast %16 : vector<1x8x128xf32> to vector<8x128xf32>
    %18 = arith.truncf %13 : vector<8x32xf32> to vector<8x32xbf16>
    %cst_19 = arith.constant dense<0.000000e+00> : vector<8x128xf32>
    %19 = tpu.matmul %18, %12, %cst_19 {dimension_numbers = #tpu.dot_dimension_numbers<[1], [0], [0], [1], [0, 0, 1, 1], [], []>} : vector<8x32xbf16>, vector<32x128xbf16>, vector<8x128xf32> -> vector<8x128xf32>
    %20 = arith.addf %17, %19 : vector<8x128xf32>
    %21 = vector.extract_strided_slice %20 {offsets = [0, 0], sizes = [8, 96], strides = [1, 1]} : vector<8x128xf32> to vector<8x96xf32>
    %22 = arith.negf %21 : vector<8x96xf32>
    %23 = math.exp %22 : vector<8x96xf32>
    %cst_20 = arith.constant 1.000000e+00 : f32
    %24 = vector.broadcast %cst_20 : f32 to vector<8x96xf32>
    %25 = arith.addf %24, %23 : vector<8x96xf32>
    %26 = arith.divf %24, %25 : vector<8x96xf32>
    %27 = vector.extract_strided_slice %26 {offsets = [0, 0], sizes = [8, 32], strides = [1, 1]} : vector<8x96xf32> to vector<8x32xf32>
    %28 = vector.extract_strided_slice %26 {offsets = [0, 32], sizes = [8, 32], strides = [1, 1]} : vector<8x96xf32> to vector<8x32xf32>
    %29 = vector.extract_strided_slice %26 {offsets = [0, 64], sizes = [8, 32], strides = [1, 1]} : vector<8x96xf32> to vector<8x32xf32>
    %30 = vector.extract_strided_slice %20 {offsets = [0, 96], sizes = [8, 32], strides = [1, 1]} : vector<8x128xf32> to vector<8x32xf32>
    %31 = math.tanh %30 : vector<8x32xf32>
    %32 = arith.mulf %28, %14 : vector<8x32xf32>
    %33 = arith.mulf %27, %31 : vector<8x32xf32>
    %34 = arith.addf %32, %33 : vector<8x32xf32>
    %35 = math.tanh %34 : vector<8x32xf32>
    %36 = arith.mulf %29, %35 : vector<8x32xf32>
    %c1_i32 = arith.constant 1 : i32
    %37 = arith.index_cast %c1_i32 : i32 to index
    %c0_21 = arith.constant 0 : index
    %c0_22 = arith.constant 0 : index
    %38 = vector.load %arg11[%37, %c0_21, %c0_22] : memref<4x8x128xf32, #tpu.memory_space<vmem>>, vector<1x8x128xf32>
    %39 = vector.shape_cast %38 : vector<1x8x128xf32> to vector<8x128xf32>
    %40 = arith.truncf %36 : vector<8x32xf32> to vector<8x32xbf16>
    %cst_23 = arith.constant dense<0.000000e+00> : vector<8x128xf32>
    %41 = tpu.matmul %40, %12, %cst_23 {dimension_numbers = #tpu.dot_dimension_numbers<[1], [0], [0], [1], [0, 0, 1, 1], [], []>} : vector<8x32xbf16>, vector<32x128xbf16>, vector<8x128xf32> -> vector<8x128xf32>
    %42 = arith.addf %39, %41 : vector<8x128xf32>
    %43 = vector.extract_strided_slice %42 {offsets = [0, 0], sizes = [8, 96], strides = [1, 1]} : vector<8x128xf32> to vector<8x96xf32>
    %44 = arith.negf %43 : vector<8x96xf32>
    %45 = math.exp %44 : vector<8x96xf32>
    %cst_24 = arith.constant 1.000000e+00 : f32
    %46 = vector.broadcast %cst_24 : f32 to vector<8x96xf32>
    %47 = arith.addf %46, %45 : vector<8x96xf32>
    %48 = arith.divf %46, %47 : vector<8x96xf32>
    %49 = vector.extract_strided_slice %48 {offsets = [0, 0], sizes = [8, 32], strides = [1, 1]} : vector<8x96xf32> to vector<8x32xf32>
    %50 = vector.extract_strided_slice %48 {offsets = [0, 32], sizes = [8, 32], strides = [1, 1]} : vector<8x96xf32> to vector<8x32xf32>
    %51 = vector.extract_strided_slice %48 {offsets = [0, 64], sizes = [8, 32], strides = [1, 1]} : vector<8x96xf32> to vector<8x32xf32>
    %52 = vector.extract_strided_slice %42 {offsets = [0, 96], sizes = [8, 32], strides = [1, 1]} : vector<8x128xf32> to vector<8x32xf32>
    %53 = math.tanh %52 : vector<8x32xf32>
    %54 = arith.mulf %50, %34 : vector<8x32xf32>
    %55 = arith.mulf %49, %53 : vector<8x32xf32>
    %56 = arith.addf %54, %55 : vector<8x32xf32>
    %57 = math.tanh %56 : vector<8x32xf32>
    %58 = arith.mulf %51, %57 : vector<8x32xf32>
    %c2_i32 = arith.constant 2 : i32
    %59 = arith.index_cast %c2_i32 : i32 to index
    %c0_25 = arith.constant 0 : index
    %c0_26 = arith.constant 0 : index
    %60 = vector.load %arg11[%59, %c0_25, %c0_26] : memref<4x8x128xf32, #tpu.memory_space<vmem>>, vector<1x8x128xf32>
    %61 = vector.shape_cast %60 : vector<1x8x128xf32> to vector<8x128xf32>
    %62 = arith.truncf %58 : vector<8x32xf32> to vector<8x32xbf16>
    %cst_27 = arith.constant dense<0.000000e+00> : vector<8x128xf32>
    %63 = tpu.matmul %62, %12, %cst_27 {dimension_numbers = #tpu.dot_dimension_numbers<[1], [0], [0], [1], [0, 0, 1, 1], [], []>} : vector<8x32xbf16>, vector<32x128xbf16>, vector<8x128xf32> -> vector<8x128xf32>
    %64 = arith.addf %61, %63 : vector<8x128xf32>
    %65 = vector.extract_strided_slice %64 {offsets = [0, 0], sizes = [8, 96], strides = [1, 1]} : vector<8x128xf32> to vector<8x96xf32>
    %66 = arith.negf %65 : vector<8x96xf32>
    %67 = math.exp %66 : vector<8x96xf32>
    %cst_28 = arith.constant 1.000000e+00 : f32
    %68 = vector.broadcast %cst_28 : f32 to vector<8x96xf32>
    %69 = arith.addf %68, %67 : vector<8x96xf32>
    %70 = arith.divf %68, %69 : vector<8x96xf32>
    %71 = vector.extract_strided_slice %70 {offsets = [0, 0], sizes = [8, 32], strides = [1, 1]} : vector<8x96xf32> to vector<8x32xf32>
    %72 = vector.extract_strided_slice %70 {offsets = [0, 32], sizes = [8, 32], strides = [1, 1]} : vector<8x96xf32> to vector<8x32xf32>
    %73 = vector.extract_strided_slice %70 {offsets = [0, 64], sizes = [8, 32], strides = [1, 1]} : vector<8x96xf32> to vector<8x32xf32>
    %74 = vector.extract_strided_slice %64 {offsets = [0, 96], sizes = [8, 32], strides = [1, 1]} : vector<8x128xf32> to vector<8x32xf32>
    %75 = math.tanh %74 : vector<8x32xf32>
    %76 = arith.mulf %72, %56 : vector<8x32xf32>
    %77 = arith.mulf %71, %75 : vector<8x32xf32>
    %78 = arith.addf %76, %77 : vector<8x32xf32>
    %79 = math.tanh %78 : vector<8x32xf32>
    %80 = arith.mulf %73, %79 : vector<8x32xf32>
    %c3_i32 = arith.constant 3 : i32
    %81 = arith.index_cast %c3_i32 : i32 to index
    %c0_29 = arith.constant 0 : index
    %c0_30 = arith.constant 0 : index
    %82 = vector.load %arg11[%81, %c0_29, %c0_30] : memref<4x8x128xf32, #tpu.memory_space<vmem>>, vector<1x8x128xf32>
    %83 = vector.shape_cast %82 : vector<1x8x128xf32> to vector<8x128xf32>
    %84 = arith.truncf %80 : vector<8x32xf32> to vector<8x32xbf16>
    %cst_31 = arith.constant dense<0.000000e+00> : vector<8x128xf32>
    %85 = tpu.matmul %84, %12, %cst_31 {dimension_numbers = #tpu.dot_dimension_numbers<[1], [0], [0], [1], [0, 0, 1, 1], [], []>} : vector<8x32xbf16>, vector<32x128xbf16>, vector<8x128xf32> -> vector<8x128xf32>
    %86 = arith.addf %83, %85 : vector<8x128xf32>
    %87 = vector.extract_strided_slice %86 {offsets = [0, 0], sizes = [8, 96], strides = [1, 1]} : vector<8x128xf32> to vector<8x96xf32>
    %88 = arith.negf %87 : vector<8x96xf32>
    %89 = math.exp %88 : vector<8x96xf32>
    %cst_32 = arith.constant 1.000000e+00 : f32
    %90 = vector.broadcast %cst_32 : f32 to vector<8x96xf32>
    %91 = arith.addf %90, %89 : vector<8x96xf32>
    %92 = arith.divf %90, %91 : vector<8x96xf32>
    %93 = vector.extract_strided_slice %92 {offsets = [0, 0], sizes = [8, 32], strides = [1, 1]} : vector<8x96xf32> to vector<8x32xf32>
    %94 = vector.extract_strided_slice %92 {offsets = [0, 32], sizes = [8, 32], strides = [1, 1]} : vector<8x96xf32> to vector<8x32xf32>
    %95 = vector.extract_strided_slice %92 {offsets = [0, 64], sizes = [8, 32], strides = [1, 1]} : vector<8x96xf32> to vector<8x32xf32>
    %96 = vector.extract_strided_slice %86 {offsets = [0, 96], sizes = [8, 32], strides = [1, 1]} : vector<8x128xf32> to vector<8x32xf32>
    %97 = math.tanh %96 : vector<8x32xf32>
    %98 = arith.mulf %94, %78 : vector<8x32xf32>
    %99 = arith.mulf %93, %97 : vector<8x32xf32>
    %100 = arith.addf %98, %99 : vector<8x32xf32>
    %101 = math.tanh %100 : vector<8x32xf32>
    %102 = arith.mulf %95, %101 : vector<8x32xf32>
    %c4_i32 = arith.constant 4 : i32
    %c0_33 = arith.constant 0 : index
    %c0_34 = arith.constant 0 : index
    %103 = vector.load %arg9[%c0_33, %c0_34] : memref<8x32xf32, #tpu.memory_space<vmem>>, vector<8x32xf32>
    tpu.vector_store %arg9[%c0_33, %c0_34], %102 {strides = array<i32>} : memref<8x32xf32, #tpu.memory_space<vmem>>, vector<8x32xf32>,
    %c0_35 = arith.constant 0 : index
    %c0_36 = arith.constant 0 : index
    %104 = vector.load %arg10[%c0_35, %c0_36] : memref<8x32xf32, #tpu.memory_space<vmem>>, vector<8x32xf32>
    tpu.vector_store %arg10[%c0_35, %c0_36], %100 {strides = array<i32>} : memref<8x32xf32, #tpu.memory_space<vmem>>, vector<8x32xf32>,
    %c1_i32_37 = arith.constant 1 : i32
    %105 = arith.cmpi eq, %arg1, %c1_i32_37 : i32
    %106 = arith.extui %105 : i1 to i32
    %c0_i32_38 = arith.constant 0 : i32
    %107 = arith.cmpi ne, %106, %c0_i32_38 : i32
    scf.if %107 {
      %c0_39 = arith.constant 0 : index
      %c0_40 = arith.constant 0 : index
      %108 = vector.load %arg6[%c0_39, %c0_40] : memref<1x32xf32, #tpu.memory_space<vmem>>, vector<1x32xf32>
      %cst_41 = arith.constant dense<0.000000e+00> : vector<1x8xf32>
      %109 = tpu.matmul %108, %102, %cst_41 {dimension_numbers = #tpu.dot_dimension_numbers<[1], [1], [0], [0], [0, 0, 1, 0], [], []>} : vector<1x32xf32>, vector<8x32xf32>, vector<1x8xf32> -> vector<1x8xf32>
      %c0_42 = arith.constant 0 : index
      %c0_43 = arith.constant 0 : index
      %110 = memref.load %arg7[%c0_42, %c0_43] : memref<1x1xf32, #tpu.memory_space<smem>>
      %111 = vector.broadcast %110 : f32 to vector<1x8xf32>
      %112 = arith.addf %109, %111 : vector<1x8xf32>
      %113 = arith.negf %112 : vector<1x8xf32>
      %114 = math.exp %113 : vector<1x8xf32>
      %cst_44 = arith.constant 1.000000e+00 : f32
      %115 = vector.broadcast %cst_44 : f32 to vector<1x8xf32>
      %116 = arith.addf %115, %114 : vector<1x8xf32>
      %117 = arith.divf %115, %116 : vector<1x8xf32>
      %c0_45 = arith.constant 0 : index
      %c0_46 = arith.constant 0 : index
      %118 = vector.load %arg8[%c0_45, %c0_46] : memref<1x8xf32, #tpu.memory_space<vmem>>, vector<1x8xf32>
      tpu.vector_store %arg8[%c0_45, %c0_46], %117 {strides = array<i32>} : memref<1x8xf32, #tpu.memory_space<vmem>>, vector<1x8xf32>,
    } else {
    }
    return
  }
  func.func @transform_0(%arg0: i32, %arg1: i32) -> (i32, i32, i32) {
    %c0_i32 = arith.constant 0 : i32
    %c0_i32_0 = arith.constant 0 : i32
    return %arg1, %arg0, %c0_i32 : i32, i32, i32
  }
  func.func @transform_1(%arg0: i32, %arg1: i32) -> (i32, i32) {
    %c0_i32 = arith.constant 0 : i32
    %c0_i32_0 = arith.constant 0 : i32
    %c0_i32_1 = arith.constant 0 : i32
    return %c0_i32, %c0_i32_0 : i32, i32
  }
  func.func @transform_2(%arg0: i32, %arg1: i32) -> (i32, i32) {
    %c0_i32 = arith.constant 0 : i32
    %c0_i32_0 = arith.constant 0 : i32
    %c0_i32_1 = arith.constant 0 : i32
    return %c0_i32, %c0_i32_0 : i32, i32
  }
  func.func @transform_3(%arg0: i32, %arg1: i32) -> (i32, i32) {
    %c0_i32 = arith.constant 0 : i32
    %c0_i32_0 = arith.constant 0 : i32
    %c0_i32_1 = arith.constant 0 : i32
    return %c0_i32, %c0_i32_0 : i32, i32
  }
  func.func @transform_4(%arg0: i32, %arg1: i32) -> (i32, i32) {
    %c0_i32 = arith.constant 0 : i32
    %c0_i32_0 = arith.constant 0 : i32
    %c0_i32_1 = arith.constant 0 : i32
    return %c0_i32, %c0_i32_0 : i32, i32
  }
  func.func @transform_5(%arg0: i32, %arg1: i32) -> (i32, i32) {
    %c0_i32 = arith.constant 0 : i32
    %c0_i32_0 = arith.constant 0 : i32
    %c0_i32_1 = arith.constant 0 : i32
    return %c0_i32, %c0_i32_0 : i32, i32
  }
  func.func @transform_6(%arg0: i32, %arg1: i32) -> (i32, i32) {
    %c0_i32 = arith.constant 0 : i32
    %c0_i32_0 = arith.constant 0 : i32
    return %c0_i32, %arg0 : i32, i32
  }
}

</mosaic_0001>

<llo_original>
// kernel: lstmc_forward.1
$region0: #{lstmc_forward.1}
  #allocation0 [shape = 'u32[]', space=smem, size = 0x4, offset = 0x4, fixed_abs, tag = 'smem constant byte address 0x4 - core index']
  #allocation1 [shape = 'u32[144,128]{1,0:T(1,128)}', space=vmem, size = 0x12000, scoped, tag = 'internal scratch']
  #allocation2 [shape = 'f32[8,32]{1,0:T(8,128)}', space=vmem, size = 0x1000, scoped, tag = 'scratch operand']
  #allocation3 [shape = 'f32[8,32]{1,0:T(8,128)}', space=vmem, size = 0x1000, scoped, tag = 'scratch operand']
  #allocation4 [shape = 'f32[4,8,128]{2,1,0:T(8,128)}', space=vmem, size = 0x4000, scoped, tag = 'scratch operand']
  #allocation5 [shape = 'f32[1,1]{1,0:T(1,128)S(6)}', space=smem, size = 0x200, scoped, tag = 'scoped memory for lstmc_forward.1']
  %s0 = inlined_call_operand.vmem [shape: bf16[8,8,32], index: 0, kind: input, shape index: {}]
  %s1 = inlined_call_operand.vmem [shape: bf16[32,128], index: 1, kind: input, shape index: {}]
  %s2 = inlined_call_operand.vmem [shape: f32[1,128], index: 2, kind: input, shape index: {}]
  %s3 = inlined_call_operand.vmem [shape: bf16[32,128], index: 3, kind: input, shape index: {}]
  %s4 = inlined_call_operand.vmem [shape: f32[1,32], index: 4, kind: input, shape index: {}]
  %s5 = inlined_call_operand.<no memory space> [shape: f32[1,1], index: 5, kind: input, shape index: {}]
  %s6 = inlined_call_operand.hbm [shape: f32[1,8], index: 6, kind: output, shape index: {}]
  %s7 = sld [smem:[#allocation0]]
  $region65: #{lstmc_forward.1} parent=0
    _
  %s9 = ssub.s32 1, %s7
  %s10 = scalar_select 0, %s9, %s7
  %11 = sst [smem:[#allocation5]] %s5
  $region1: #{lstmc_forward.1} parent=0
    #allocation6 [shape = 'u8[512]{0}', space=vmem, size = 0x400, scoped, tag = 'output window, operand 0, single buffered']
    #allocation7 [shape = 's32[2]{0}', space=sflag, size = 0x8, scoped, tag = 'scoped memory for lstmc_forward.1']
    %12 = vsyncpa [#allocation7], 0
    loop: start=0, step=1, limit=4
    $region2: #{lstmc_forward.1} parent=1 // loop_pre_header
      _
    $region3: #{lstmc_forward.1} parent=1 // loop_header
      %s14 = sphi 0, %s18
      %p15 = scmp.ge.s32.totalorder %s14, 4
      %s21 = sphi 0, %s33
      %s22 = sphi 0, %s29
      %s23 = sphi 0, %s21
      %s24 = sphi 0, %s22
      %s25 = sphi 0, %s23
      %s26 = sphi 0, %s24
      %s38 = sphi 0, %s40
      %s41 = sphi 0, %s38
      %s42 = sphi 0, %s41
      %s58 = sphi 0, %s42
      %s62 = sphi 0, %s62
      %s64 = sphi 0, %s62
      %s65 = sphi 0, %s64
      %s79 = sphi 0, %s65
      %s83 = sphi 0, %s83
      %s85 = sphi 0, %s83
      %s86 = sphi 0, %s85
      %s100 = sphi 0, %s86
      %s104 = sphi 0, %s104
      %s106 = sphi 0, %s104
      %s107 = sphi 0, %s106
      %s121 = sphi 0, %s107
      %s125 = sphi 0, %s125
      %s127 = sphi 0, %s125
      %s128 = sphi 0, %s127
      %s142 = sphi 0, %s128
      %s146 = sphi 0, %s146
      %s148 = sphi 0, %s146
      %s149 = sphi 0, %s148
      %s163 = sphi 0, %s149
      %s169 = sphi 0, %s171
      %s172 = sphi 0, %s169
      %s173 = sphi 0, %s172
      %s189 = sphi 0, %s173
    $region4: #{lstmc_forward.1} parent=1 // loop_header_branch
      %17 = sbr.rel (%p15) target = $region8
    $region5: #{lstmc_forward.1} parent=1 // loop_body
      %s19 = ssub.s32 %s14, 1
      %s20 = ssub.s32 %s14, 2
      %s27 = sadd.s32 1, %s22
      %p28 = scmp.ge.s32.totalorder %s27, 2
      %s29 = scalar_select %p28, 0, %s27
      %s30 = sadd.s32 1, %s21
      %s31 = scalar_select %p28, %s30, %s21
      %p32 = scmp.ge.s32.totalorder %s31, 1
      %s33 = scalar_select %p32, 0, %s31
      %s34 = ssub.s32 %s22, %s29
      %s35 = ssub.s32 %s21, %s33
      %s36 = sor.u32 %s34, %s35
      %p37 = scmp.eq.s32.totalorder %s36, 0
      %s39 = sadd.s32 %s38, 1
      %s40 = scalar_select %p37, %s38, %s39
      %p43 = pneg %p37
      %p44 = scmp.eq.s32.totalorder %s14, 1
      %p45 = por %p43, %p44
      %p46 = scmp.ne.s32.totalorder %s38, %s41
      %p47 = scmp.eq.s32.totalorder %s14, 0
      %p48 = por %p46, %p47
      %p49 = scmp.ne.s32.totalorder %s38, %s41
      %p50 = scmp.eq.s32.totalorder %s19, 1
      %p51 = por %p49, %p50
      %p52 = scmp.ne.s32.totalorder %s41, %s42
      %p53 = scmp.eq.s32.totalorder %s19, 0
      %p54 = por %p52, %p53
      %p55 = scmp.ne.s32.totalorder %s41, %s42
      %p56 = scmp.eq.s32.totalorder %s20, 1
      %p57 = por %p55, %p56
      %p59 = scmp.ne.s32.totalorder %s42, %s58
      %p60 = scmp.eq.s32.totalorder %s20, 0
      %p61 = por %p59, %p60
      %s63 = sadd.s32 %s62, 1
      %p66 = scmp.eq.s32.totalorder %s14, 1
      %p67 = scmp.ne.s32.totalorder %s62, %s64
      %p68 = scmp.eq.s32.totalorder %s14, 0
      %p69 = por %p67, %p68
      %p70 = scmp.ne.s32.totalorder %s62, %s64
      %p71 = scmp.eq.s32.totalorder %s19, 1
      %p72 = por %p70, %p71
      %p73 = scmp.ne.s32.totalorder %s64, %s65
      %p74 = scmp.eq.s32.totalorder %s19, 0
      %p75 = por %p73, %p74
      %p76 = scmp.ne.s32.totalorder %s64, %s65
      %p77 = scmp.eq.s32.totalorder %s20, 1
      %p78 = por %p76, %p77
      %p80 = scmp.ne.s32.totalorder %s65, %s79
      %p81 = scmp.eq.s32.totalorder %s20, 0
      %p82 = por %p80, %p81
      %s84 = sadd.s32 %s83, 1
      %p87 = scmp.eq.s32.totalorder %s14, 1
      %p88 = scmp.ne.s32.totalorder %s83, %s85
      %p89 = scmp.eq.s32.totalorder %s14, 0
      %p90 = por %p88, %p89
      %p91 = scmp.ne.s32.totalorder %s83, %s85
      %p92 = scmp.eq.s32.totalorder %s19, 1
      %p93 = por %p91, %p92
      %p94 = scmp.ne.s32.totalorder %s85, %s86
      %p95 = scmp.eq.s32.totalorder %s19, 0
      %p96 = por %p94, %p95
      %p97 = scmp.ne.s32.totalorder %s85, %s86
      %p98 = scmp.eq.s32.totalorder %s20, 1
      %p99 = por %p97, %p98
      %p101 = scmp.ne.s32.totalorder %s86, %s100
      %p102 = scmp.eq.s32.totalorder %s20, 0
      %p103 = por %p101, %p102
      %s105 = sadd.s32 %s104, 1
      %p108 = scmp.eq.s32.totalorder %s14, 1
      %p109 = scmp.ne.s32.totalorder %s104, %s106
      %p110 = scmp.eq.s32.totalorder %s14, 0
      %p111 = por %p109, %p110
      %p112 = scmp.ne.s32.totalorder %s104, %s106
      %p113 = scmp.eq.s32.totalorder %s19, 1
      %p114 = por %p112, %p113
      %p115 = scmp.ne.s32.totalorder %s106, %s107
      %p116 = scmp.eq.s32.totalorder %s19, 0
      %p117 = por %p115, %p116
      %p118 = scmp.ne.s32.totalorder %s106, %s107
      %p119 = scmp.eq.s32.totalorder %s20, 1
      %p120 = por %p118, %p119
      %p122 = scmp.ne.s32.totalorder %s107, %s121
      %p123 = scmp.eq.s32.totalorder %s20, 0
      %p124 = por %p122, %p123
      %s126 = sadd.s32 %s125, 1
      %p129 = scmp.eq.s32.totalorder %s14, 1
      %p130 = scmp.ne.s32.totalorder %s125, %s127
      %p131 = scmp.eq.s32.totalorder %s14, 0
      %p132 = por %p130, %p131
      %p133 = scmp.ne.s32.totalorder %s125, %s127
      %p134 = scmp.eq.s32.totalorder %s19, 1
      %p135 = por %p133, %p134
      %p136 = scmp.ne.s32.totalorder %s127, %s128
      %p137 = scmp.eq.s32.totalorder %s19, 0
      %p138 = por %p136, %p137
      %p139 = scmp.ne.s32.totalorder %s127, %s128
      %p140 = scmp.eq.s32.totalorder %s20, 1
      %p141 = por %p139, %p140
      %p143 = scmp.ne.s32.totalorder %s128, %s142
      %p144 = scmp.eq.s32.totalorder %s20, 0
      %p145 = por %p143, %p144
      %s147 = sadd.s32 %s146, 1
      %p150 = scmp.eq.s32.totalorder %s14, 1
      %p151 = scmp.ne.s32.totalorder %s146, %s148
      %p152 = scmp.eq.s32.totalorder %s14, 0
      %p153 = por %p151, %p152
      %p154 = scmp.ne.s32.totalorder %s146, %s148
      %p155 = scmp.eq.s32.totalorder %s19, 1
      %p156 = por %p154, %p155
      %p157 = scmp.ne.s32.totalorder %s148, %s149
      %p158 = scmp.eq.s32.totalorder %s19, 0
      %p159 = por %p157, %p158
      %p160 = scmp.ne.s32.totalorder %s148, %s149
      %p161 = scmp.eq.s32.totalorder %s20, 1
      %p162 = por %p160, %p161
      %p164 = scmp.ne.s32.totalorder %s149, %s163
      %p165 = scmp.eq.s32.totalorder %s20, 0
      %p166 = por %p164, %p165
      %s167 = ssub.s32 %s21, %s33
      %p168 = scmp.eq.s32.totalorder %s167, 0
      %s170 = sadd.s32 %s169, 1
      %s171 = scalar_select %p168, %s169, %s170
      %p174 = pneg %p168
      %p175 = scmp.eq.s32.totalorder %s14, 1
      %p176 = por %p174, %p175
      %p177 = scmp.ne.s32.totalorder %s169, %s172
      %p178 = scmp.eq.s32.totalorder %s14, 0
      %p179 = por %p177, %p178
      %p180 = scmp.ne.s32.totalorder %s169, %s172
      %p181 = scmp.eq.s32.totalorder %s19, 1
      %p182 = por %p180, %p181
      %p183 = scmp.ne.s32.totalorder %s172, %s173
      %p184 = scmp.eq.s32.totalorder %s19, 0
      %p185 = por %p183, %p184
      %p186 = scmp.ne.s32.totalorder %s172, %s173
      %p187 = scmp.eq.s32.totalorder %s20, 1
      %p188 = por %p186, %p187
      %p190 = scmp.ne.s32.totalorder %s173, %s189
      %p191 = scmp.eq.s32.totalorder %s20, 0
      %p192 = por %p190, %p191
      %p193 = scmp.le.s32.totalorder 1, %s14
      %p194 = scmp.lt.s32.totalorder %s14, 3
      %p195 = pnand %p193, %p194
      %p196 = pneg %p195
      // Predicated region
      $region9: #{lstmc_forward.1} parent=5 // pred_check
        _
      $region10: #{lstmc_forward.1} parent=5 // pred_check_branch
        %198 = sbr.rel (%p195) target = $region12
      $region11: #{lstmc_forward.1} parent=5 // pred_region
        %s199 = ssub.s32 %s14, 1
        // Predicated region
        $region13: #{lstmc_forward.1} parent=11 // pred_check
          %p200 = pneg %p75
        $region14: #{lstmc_forward.1} parent=11 // pred_check_branch
          %202 = sbr.rel (%p200) target = $region16
        $region15: #{lstmc_forward.1} parent=11 // pred_region
          _
        $region16: #{lstmc_forward.1} parent=11 // pred_fallthru
          _
        // Predicated region
        $region17: #{lstmc_forward.1} parent=11 // pred_check
          %p203 = pneg %p96
        $region18: #{lstmc_forward.1} parent=11 // pred_check_branch
          %205 = sbr.rel (%p203) target = $region20
        $region19: #{lstmc_forward.1} parent=11 // pred_region
          _
        $region20: #{lstmc_forward.1} parent=11 // pred_fallthru
          _
        // Predicated region
        $region21: #{lstmc_forward.1} parent=11 // pred_check
          %p206 = pneg %p117
        $region22: #{lstmc_forward.1} parent=11 // pred_check_branch
          %208 = sbr.rel (%p206) target = $region24
        $region23: #{lstmc_forward.1} parent=11 // pred_region
          _
        $region24: #{lstmc_forward.1} parent=11 // pred_fallthru
          _
        // Predicated region
        $region25: #{lstmc_forward.1} parent=11 // pred_check
          %p209 = pneg %p138
        $region26: #{lstmc_forward.1} parent=11 // pred_check_branch
          %211 = sbr.rel (%p209) target = $region28
        $region27: #{lstmc_forward.1} parent=11 // pred_region
          _
        $region28: #{lstmc_forward.1} parent=11 // pred_fallthru
          _
        // Predicated region
        $region29: #{lstmc_forward.1} parent=11 // pred_check
          %p212 = pneg %p159
        $region30: #{lstmc_forward.1} parent=11 // pred_check_branch
          %214 = sbr.rel (%p212) target = $region32
        $region31: #{lstmc_forward.1} parent=11 // pred_region
          _
        $region32: #{lstmc_forward.1} parent=11 // pred_fallthru
          _
      $region12: #{lstmc_forward.1} parent=5 // pred_fallthru
        _
      %p215 = scmp.lt.s32.totalorder %s14, 2
      // Predicated region
      $region33: #{lstmc_forward.1} parent=5 // pred_check
        %p216 = pneg %p215
      $region34: #{lstmc_forward.1} parent=5 // pred_check_branch
        %218 = sbr.rel (%p216) target = $region36
      $region35: #{lstmc_forward.1} parent=5 // pred_region
        // Predicated region
        $region37: #{lstmc_forward.1} parent=35 // pred_check
          %p219 = pneg %p48
        $region38: #{lstmc_forward.1} parent=35 // pred_check_branch
          %221 = sbr.rel (%p219) target = $region40
        $region39: #{lstmc_forward.1} parent=35 // pred_region
          %s222 = smul.u32 4, %s22
          %p223 = scmp.lt.s32.totalorder %s222, 7
          %s224 = scalar_select %p223, %s222, 7
          %p225 = scmp.lt.s32.totalorder %s21, 0
          %s226 = scalar_select %p225, %s21, 0
          %s227 = sadd.s32 %s226, %s224
          %s228 = smul.addr %s227, 4
          %s229 = scalar_lea.vmem %s0, %s228
          %s230 = smul.u32 4, %s22
        $region40: #{lstmc_forward.1} parent=35 // pred_fallthru
          _
      $region36: #{lstmc_forward.1} parent=5 // pred_fallthru
        _
      %p231 = scmp.le.s32.totalorder 1, %s14
      %p232 = scmp.lt.s32.totalorder %s14, 3
      %p233 = pnand %p231, %p232
      %p234 = pneg %p233
      // Predicated region
      $region41: #{lstmc_forward.1} parent=5 // pred_check
        _
      $region42: #{lstmc_forward.1} parent=5 // pred_check_branch
        %236 = sbr.rel (%p233) target = $region44
      $region43: #{lstmc_forward.1} parent=5 // pred_region
        %s237 = ssub.s32 %s14, 1
        %s238 = smul.u32 4, %s24
        %p239 = scmp.lt.s32.totalorder %s238, 7
        %s240 = scalar_select %p239, %s238, 7
        %p241 = scmp.lt.s32.totalorder %s23, 0
        %s242 = scalar_select %p241, %s23, 0
        %s243 = sadd.s32 %s242, %s240
        %s244 = smul.addr %s243, 4
        %s245 = scalar_lea.vmem %s0, %s244
        %p246 = pneg %p54
        %p247 = pneg %p51
        %p248 = pneg %p75
        %p249 = pneg %p72
        %p250 = pneg %p96
        %p251 = pneg %p93
        %p252 = pneg %p117
        %p253 = pneg %p114
        %p254 = pneg %p138
        %p255 = pneg %p135
        %p256 = pneg %p159
        %p257 = pneg %p156
        %p258 = pneg %p185
        %p259 = pneg %p182
        %s260 = smul.u32 4, %s24
        %p261 = scmp.lt.s32.totalorder %s260, 7
        %s262 = scalar_select %p261, %s260, 7
        %p263 = scmp.lt.s32.totalorder %s23, 0
        %s264 = scalar_select %p263, %s23, 0
        %s265 = sadd.s32 %s264, %s262
        %s266 = smul.addr %s265, 4
        %s267 = scalar_lea.vmem %s0, %s266
        %s268 = smul.u32 4, %s24
        %p270 = scmp.eq.s32.totalorder %s24, 0
        // Predicated region
        $region45: #{lstmc_forward.1} parent=43 // pred_check
          %p271 = pneg %p270
        $region46: #{lstmc_forward.1} parent=43 // pred_check_branch
          %273 = sbr.rel (%p271) target = $region48
        $region47: #{lstmc_forward.1} parent=43 // pred_region
          %vm274 = vcmask 261120
          %275 = vst.msk [vmem:[#allocation2] sm:$0xff] %vm274, 0.0
          %276 = vst.msk [vmem:[#allocation3] sm:$0xff] %vm274, 0.0
        $region48: #{lstmc_forward.1} parent=43 // pred_fallthru
          _
        %v277 = vld [vmem:[%s267] sm:$0xf]
        %v278 = vld [vmem:[%s267 + $0x4] sm:$0xf]
        %v279 = vld [vmem:[%s267 + $0x8] sm:$0xf]
        %v280 = vld [vmem:[%s267 + $0xc] sm:$0xf]
        %v281 = vld [vmem:[%s1] sm:$0xf]
        %v282 = vld [vmem:[%s1 + $0x4] sm:$0xf]
        %v283 = vld [vmem:[%s1 + $0x8] sm:$0xf]
        %v284 = vld [vmem:[%s1 + $0xc] sm:$0xf]
        %v285 = vld [vmem:[%s2] sm:$0x1]
        %v287 = vlaneseq
        %v288 = vshrl.u32 %v287, 7
        %v289 = vsub.s32 0, %v288
        %v290 = vrot.slane %v285, %v289
        %v296 = vunpack.c.l.b16 %v277
        %v297 = vunpack.c.l.b16 %v278
        %v298 = vunpack.c.l.b16 %v279
        %v299 = vunpack.c.l.b16 %v280
        %v300 = vpack.c.b16 %v297, %v296
        %v301 = vpack.c.b16 %v299, %v298
        %v306 = vunpack.c.l.b16 %v281
        %v307 = vunpack.c.l.b16 %v282
        %v308 = vunpack.c.l.b16 %v283
        %v309 = vunpack.c.l.b16 %v284
        %v310 = vpack.c.b16 %v307, %v306
        %v311 = vpack.c.b16 %v309, %v308
        %vm314 = vcmask 261120
        %v316 = vsel %vm314, %v300, 0
        %v319 = vsel %vm314, %v301, 0
        %321 = vmatprep.subr.bf16.mxu0 0
        %322 = vmatpush1.bf16.msra.mxu0 0
        %323 = vmatprep.subr.bf16.mxu0 0
        %324 = vmatpush1.bf16.msra.mxu0 0
        %325 = vmatprep.subr.bf16.mxu0 0
        %326 = vmatpush1.bf16.msra.mxu0 0
        %327 = vmatprep.subr.bf16.mxu0 0
        %328 = vmatpush1.bf16.msra.mxu0 0
        %329 = vmatprep.subr.bf16.mxu0 0
        %330 = vmatpush1.bf16.msra.mxu0 0
        %331 = vmatprep.subr.bf16.mxu0 0
        %332 = vmatpush1.bf16.msra.mxu0 0
        %333 = vmatprep.subr.bf16.mxu0 0
        %334 = vmatpush1.bf16.msra.mxu0 %v311
        %335 = vmatprep.subr.bf16.mxu0 0
        %336 = vmatpush1.bf16.msra.mxu0 %v310
        %337 = vmatprep.subr.bf16.mxu0 0
        %338 = vmatpush2.bf16.msra.mxu0 0
        %339 = vmatprep.subr.bf16.mxu0 0
        %340 = vmatpush2.bf16.msra.mxu0 0
        %341 = vmatprep.subr.bf16.mxu0 0
        %342 = vmatpush2.bf16.msra.mxu0 0
        %343 = vmatprep.subr.bf16.mxu0 0
        %344 = vmatpush2.bf16.msra.mxu0 0
        %345 = vmatprep.subr.bf16.mxu0 0
        %346 = vmatpush2.bf16.msra.mxu0 0
        %347 = vmatprep.subr.bf16.mxu0 0
        %348 = vmatpush2.bf16.msra.mxu0 0
        %349 = vmatprep.subr.bf16.mxu0 0
        %350 = vmatpush2.bf16.msra.mxu0 0
        %351 = vmatprep.subr.bf16.mxu0 0
        %352 = vmatpush2.bf16.msra.mxu0 0
        %353 = vmatprep.mubr.bf16.mxu0 0
        %354 = vmatmul.mubr.bf16.gmra.mxu0 %v316
        %v355 = vpop.f32.mrf.mxu0
        %v356 = vadd.f32 %v290, %v355
        %v357 = vpop.f32.mrf.mxu0
        %v358 = vpop.f32.mrf.mxu0
        %v359 = vadd.f32 %v290, %v358
        %v360 = vpop.f32.mrf.mxu0
        %361 = vmatprep.mubr.bf16.mxu0 0
        %362 = vmatmul.mubr.bf16.gmra.mxu0 %v319
        %v363 = vpop.f32.mrf.mxu0
        %v364 = vadd.f32 %v290, %v363
        %v365 = vpop.f32.mrf.mxu0
        %v366 = vpop.f32.mrf.mxu0
        %v367 = vadd.f32 %v290, %v366
        %v368 = vpop.f32.mrf.mxu0
        %369 = vdwg.mxu0
        %370 = vst [vmem:[#allocation4] sm:$0xff] %v356
        %371 = vst [vmem:[#allocation4 + $0x8] sm:$0xff] %v359
        %372 = vst [vmem:[#allocation4 + $0x10] sm:$0xff] %v364
        %373 = vst [vmem:[#allocation4 + $0x18] sm:$0xff] %v367
        %v374 = vld [vmem:[%s3] sm:$0xf]
        %v375 = vld [vmem:[%s3 + $0x4] sm:$0xf]
        %v376 = vld [vmem:[%s3 + $0x8] sm:$0xf]
        %v377 = vld [vmem:[%s3 + $0xc] sm:$0xf]
        %v378 = vld [vmem:[#allocation2] sm:$0xff]
        %v379 = vld [vmem:[#allocation3] sm:$0xff]
        %v380 = vld [vmem:[#allocation4] sm:$0xff]
        %v381 = vpack.c.bf16 %v378, %v378
        %v386 = vunpack.c.l.b16 %v374
        %v387 = vunpack.c.l.b16 %v375
        %v388 = vunpack.c.l.b16 %v376
        %v389 = vunpack.c.l.b16 %v377
        %v390 = vpack.c.b16 %v387, %v386
        %v391 = vpack.c.b16 %v389, %v388
        %v395 = vsel %vm314, %v381, 0
        %397 = vmatprep.subr.bf16.mxu0 0
        %398 = vmatpush1.bf16.msra.mxu0 0
        %399 = vmatprep.subr.bf16.mxu0 0
        %400 = vmatpush1.bf16.msra.mxu0 0
        %401 = vmatprep.subr.bf16.mxu0 0
        %402 = vmatpush1.bf16.msra.mxu0 0
        %403 = vmatprep.subr.bf16.mxu0 0
        %404 = vmatpush1.bf16.msra.mxu0 0
        %405 = vmatprep.subr.bf16.mxu0 0
        %406 = vmatpush1.bf16.msra.mxu0 0
        %407 = vmatprep.subr.bf16.mxu0 0
        %408 = vmatpush1.bf16.msra.mxu0 0
        %409 = vmatprep.subr.bf16.mxu0 0
        %410 = vmatpush1.bf16.msra.mxu0 %v391
        %411 = vmatprep.subr.bf16.mxu0 0
        %412 = vmatpush1.bf16.msra.mxu0 %v390
        %413 = vmatprep.subr.bf16.mxu0 0
        %414 = vmatpush2.bf16.msra.mxu0 0
        %415 = vmatprep.subr.bf16.mxu0 0
        %416 = vmatpush2.bf16.msra.mxu0 0
        %417 = vmatprep.subr.bf16.mxu0 0
        %418 = vmatpush2.bf16.msra.mxu0 0
        %419 = vmatprep.subr.bf16.mxu0 0
        %420 = vmatpush2.bf16.msra.mxu0 0
        %421 = vmatprep.subr.bf16.mxu0 0
        %422 = vmatpush2.bf16.msra.mxu0 0
        %423 = vmatprep.subr.bf16.mxu0 0
        %424 = vmatpush2.bf16.msra.mxu0 0
        %425 = vmatprep.subr.bf16.mxu0 0
        %426 = vmatpush2.bf16.msra.mxu0 0
        %427 = vmatprep.subr.bf16.mxu0 0
        %428 = vmatpush2.bf16.msra.mxu0 0
        %429 = vmatprep.mubr.bf16.mxu0 0
        %430 = vmatmul.mubr.bf16.gmra.mxu0 %v395
        %v431 = vpop.f32.mrf.mxu0
        %v432 = vadd.f32 0.0, %v431
        %v433 = vpop.f32.mrf.mxu0
        %v434 = vpop.f32.mrf.mxu0
        %v435 = vpop.f32.mrf.mxu0
        %436 = vdwg.mxu0
        %v437 = vadd.f32 %v380, %v432
        %v438 = vxor.u32 %v437, 2147483648
        %v439 = vmul.f32 %v438, 1.442695
        %v440 = vpow.pop %v439
        %v441 = vadd.f32 %v440, 1.0
        %v442 = vrcp.pop %v441
        %v443 = vmul.f32 1.0, %v442
        %v444 = vtanh.pop %v437
        %446 = vrot.lane.b32.xlu0 %v379, 32
        %v447 = vpop.permute.xlu0 %446
        %v449 = vmul.f32 %v443, %v447
        %451 = vrot.lane.b32.xlu0 %v444, 32
        %v452 = vpop.permute.xlu0 %451
        %v454 = vmul.f32 %v443, %v452
        %456 = vrot.lane.b32.xlu0 %v454, 32
        %v457 = vpop.permute.xlu0 %456
        %v459 = vadd.f32 %v449, %v457
        %v460 = vtanh.pop %v459
        %462 = vrot.lane.b32.xlu0 %v460, 32
        %v463 = vpop.permute.xlu0 %462
        %v465 = vmul.f32 %v443, %v463
        %s466 = scalar_lea.vmem [#allocation4], 8
        %v467 = vld [vmem:[%s466] sm:$0xff]
        %v468 = vpack.c.bf16 %v465, %v465
        %470 = vrot.lane.b32.xlu0 %v468, 64
        %v471 = vpop.permute.xlu0 %470
        %v473 = vsel %vm314, %v471, 0
        %475 = vmatprep.subr.bf16.mxu0 0
        %476 = vmatpush1.bf16.msra.mxu0 0
        %477 = vmatprep.subr.bf16.mxu0 0
        %478 = vmatpush1.bf16.msra.mxu0 0
        %479 = vmatprep.subr.bf16.mxu0 0
        %480 = vmatpush1.bf16.msra.mxu0 0
        %481 = vmatprep.subr.bf16.mxu0 0
        %482 = vmatpush1.bf16.msra.mxu0 0
        %483 = vmatprep.subr.bf16.mxu0 0
        %484 = vmatpush1.bf16.msra.mxu0 0
        %485 = vmatprep.subr.bf16.mxu0 0
        %486 = vmatpush1.bf16.msra.mxu0 0
        %487 = vmatprep.subr.bf16.mxu0 0
        %488 = vmatpush1.bf16.msra.mxu0 %v391
        %489 = vmatprep.subr.bf16.mxu0 0
        %490 = vmatpush1.bf16.msra.mxu0 %v390
        %491 = vmatprep.subr.bf16.mxu0 0
        %492 = vmatpush2.bf16.msra.mxu0 0
        %493 = vmatprep.subr.bf16.mxu0 0
        %494 = vmatpush2.bf16.msra.mxu0 0
        %495 = vmatprep.subr.bf16.mxu0 0
        %496 = vmatpush2.bf16.msra.mxu0 0
        %497 = vmatprep.subr.bf16.mxu0 0
        %498 = vmatpush2.bf16.msra.mxu0 0
        %499 = vmatprep.subr.bf16.mxu0 0
        %500 = vmatpush2.bf16.msra.mxu0 0
        %501 = vmatprep.subr.bf16.mxu0 0
        %502 = vmatpush2.bf16.msra.mxu0 0
        %503 = vmatprep.subr.bf16.mxu0 0
        %504 = vmatpush2.bf16.msra.mxu0 0
        %505 = vmatprep.subr.bf16.mxu0 0
        %506 = vmatpush2.bf16.msra.mxu0 0
        %507 = vmatprep.mubr.bf16.mxu0 0
        %508 = vmatmul.mubr.bf16.gmra.mxu0 %v473
        %v509 = vpop.f32.mrf.mxu0
        %v510 = vadd.f32 0.0, %v509
        %v511 = vpop.f32.mrf.mxu0
        %v512 = vpop.f32.mrf.mxu0
        %v513 = vpop.f32.mrf.mxu0
        %514 = vdwg.mxu0
        %v515 = vadd.f32 %v467, %v510
        %v516 = vxor.u32 %v515, 2147483648
        %v517 = vmul.f32 %v516, 1.442695
        %v518 = vpow.pop %v517
        %v519 = vadd.f32 %v518, 1.0
        %v520 = vrcp.pop %v519
        %v521 = vmul.f32 1.0, %v520
        %v522 = vtanh.pop %v515
        %v523 = vmul.f32 %v521, %v459
        %525 = vrot.lane.b32.xlu0 %v522, 32
        %v526 = vpop.permute.xlu0 %525
        %v528 = vmul.f32 %v521, %v526
        %530 = vrot.lane.b32.xlu0 %v528, 32
        %v531 = vpop.permute.xlu0 %530
        %v533 = vadd.f32 %v523, %v531
        %v534 = vtanh.pop %v533
        %536 = vrot.lane.b32.xlu0 %v534, 32
        %v537 = vpop.permute.xlu0 %536
        %v539 = vmul.f32 %v521, %v537
        %s540 = scalar_lea.vmem [#allocation4], 16
        %v541 = vld [vmem:[%s540] sm:$0xff]
        %v542 = vpack.c.bf16 %v539, %v539
        %544 = vrot.lane.b32.xlu0 %v542, 64
        %v545 = vpop.permute.xlu0 %544
        %v547 = vsel %vm314, %v545, 0
        %549 = vmatprep.subr.bf16.mxu0 0
        %550 = vmatpush1.bf16.msra.mxu0 0
        %551 = vmatprep.subr.bf16.mxu0 0
        %552 = vmatpush1.bf16.msra.mxu0 0
        %553 = vmatprep.subr.bf16.mxu0 0
        %554 = vmatpush1.bf16.msra.mxu0 0
        %555 = vmatprep.subr.bf16.mxu0 0
        %556 = vmatpush1.bf16.msra.mxu0 0
        %557 = vmatprep.subr.bf16.mxu0 0
        %558 = vmatpush1.bf16.msra.mxu0 0
        %559 = vmatprep.subr.bf16.mxu0 0
        %560 = vmatpush1.bf16.msra.mxu0 0
        %561 = vmatprep.subr.bf16.mxu0 0
        %562 = vmatpush1.bf16.msra.mxu0 %v391
        %563 = vmatprep.subr.bf16.mxu0 0
        %564 = vmatpush1.bf16.msra.mxu0 %v390
        %565 = vmatprep.subr.bf16.mxu0 0
        %566 = vmatpush2.bf16.msra.mxu0 0
        %567 = vmatprep.subr.bf16.mxu0 0
        %568 = vmatpush2.bf16.msra.mxu0 0
        %569 = vmatprep.subr.bf16.mxu0 0
        %570 = vmatpush2.bf16.msra.mxu0 0
        %571 = vmatprep.subr.bf16.mxu0 0
        %572 = vmatpush2.bf16.msra.mxu0 0
        %573 = vmatprep.subr.bf16.mxu0 0
        %574 = vmatpush2.bf16.msra.mxu0 0
        %575 = vmatprep.subr.bf16.mxu0 0
        %576 = vmatpush2.bf16.msra.mxu0 0
        %577 = vmatprep.subr.bf16.mxu0 0
        %578 = vmatpush2.bf16.msra.mxu0 0
        %579 = vmatprep.subr.bf16.mxu0 0
        %580 = vmatpush2.bf16.msra.mxu0 0
        %581 = vmatprep.mubr.bf16.mxu0 0
        %582 = vmatmul.mubr.bf16.gmra.mxu0 %v547
        %v583 = vpop.f32.mrf.mxu0
        %v584 = vadd.f32 0.0, %v583
        %v585 = vpop.f32.mrf.mxu0
        %v586 = vpop.f32.mrf.mxu0
        %v587 = vpop.f32.mrf.mxu0
        %588 = vdwg.mxu0
        %v589 = vadd.f32 %v541, %v584
        %v590 = vxor.u32 %v589, 2147483648
        %v591 = vmul.f32 %v590, 1.442695
        %v592 = vpow.pop %v591
        %v593 = vadd.f32 %v592, 1.0
        %v594 = vrcp.pop %v593
        %v595 = vmul.f32 1.0, %v594
        %v596 = vtanh.pop %v589
        %v597 = vmul.f32 %v595, %v533
        %599 = vrot.lane.b32.xlu0 %v596, 32
        %v600 = vpop.permute.xlu0 %599
        %v602 = vmul.f32 %v595, %v600
        %604 = vrot.lane.b32.xlu0 %v602, 32
        %v605 = vpop.permute.xlu0 %604
        %v607 = vadd.f32 %v597, %v605
        %v608 = vtanh.pop %v607
        %610 = vrot.lane.b32.xlu0 %v608, 32
        %v611 = vpop.permute.xlu0 %610
        %v613 = vmul.f32 %v595, %v611
        %s614 = scalar_lea.vmem [#allocation4], 24
        %v615 = vld [vmem:[%s614] sm:$0xff]
        %v616 = vpack.c.bf16 %v613, %v613
        %618 = vrot.lane.b32.xlu0 %v616, 64
        %v619 = vpop.permute.xlu0 %618
        %v621 = vsel %vm314, %v619, 0
        %623 = vmatprep.subr.bf16.mxu0 0
        %624 = vmatpush1.bf16.msra.mxu0 0
        %625 = vmatprep.subr.bf16.mxu0 0
        %626 = vmatpush1.bf16.msra.mxu0 0
        %627 = vmatprep.subr.bf16.mxu0 0
        %628 = vmatpush1.bf16.msra.mxu0 0
        %629 = vmatprep.subr.bf16.mxu0 0
        %630 = vmatpush1.bf16.msra.mxu0 0
        %631 = vmatprep.subr.bf16.mxu0 0
        %632 = vmatpush1.bf16.msra.mxu0 0
        %633 = vmatprep.subr.bf16.mxu0 0
        %634 = vmatpush1.bf16.msra.mxu0 0
        %635 = vmatprep.subr.bf16.mxu0 0
        %636 = vmatpush1.bf16.msra.mxu0 %v391
        %637 = vmatprep.subr.bf16.mxu0 0
        %638 = vmatpush1.bf16.msra.mxu0 %v390
        %639 = vmatprep.subr.bf16.mxu0 0
        %640 = vmatpush2.bf16.msra.mxu0 0
        %641 = vmatprep.subr.bf16.mxu0 0
        %642 = vmatpush2.bf16.msra.mxu0 0
        %643 = vmatprep.subr.bf16.mxu0 0
        %644 = vmatpush2.bf16.msra.mxu0 0
        %645 = vmatprep.subr.bf16.mxu0 0
        %646 = vmatpush2.bf16.msra.mxu0 0
        %647 = vmatprep.subr.bf16.mxu0 0
        %648 = vmatpush2.bf16.msra.mxu0 0
        %649 = vmatprep.subr.bf16.mxu0 0
        %650 = vmatpush2.bf16.msra.mxu0 0
        %651 = vmatprep.subr.bf16.mxu0 0
        %652 = vmatpush2.bf16.msra.mxu0 0
        %653 = vmatprep.subr.bf16.mxu0 0
        %654 = vmatpush2.bf16.msra.mxu0 0
        %655 = vmatprep.mubr.bf16.mxu0 0
        %656 = vmatmul.mubr.bf16.gmra.mxu0 %v621
        %v657 = vpop.f32.mrf.mxu0
        %v658 = vadd.f32 0.0, %v657
        %v659 = vpop.f32.mrf.mxu0
        %v660 = vpop.f32.mrf.mxu0
        %v661 = vpop.f32.mrf.mxu0
        %662 = vdwg.mxu0
        %v663 = vadd.f32 %v615, %v658
        %v664 = vxor.u32 %v663, 2147483648
        %v665 = vmul.f32 %v664, 1.442695
        %v666 = vpow.pop %v665
        %v667 = vadd.f32 %v666, 1.0
        %v668 = vrcp.pop %v667
        %v669 = vmul.f32 1.0, %v668
        %v670 = vtanh.pop %v663
        %v671 = vmul.f32 %v669, %v607
        %673 = vrot.lane.b32.xlu0 %v670, 32
        %v674 = vpop.permute.xlu0 %673
        %v676 = vmul.f32 %v669, %v674
        %678 = vrot.lane.b32.xlu0 %v676, 32
        %v679 = vpop.permute.xlu0 %678
        %v681 = vadd.f32 %v671, %v679
        %v682 = vtanh.pop %v681
        %684 = vrot.lane.b32.xlu0 %v682, 32
        %v685 = vpop.permute.xlu0 %684
        %v687 = vmul.f32 %v669, %v685
        %689 = vrot.lane.b32.xlu0 %v687, 64
        %v690 = vpop.permute.xlu0 %689
        %692 = vst.msk [vmem:[#allocation2] sm:$0xff] %vm314, %v690
        %694 = vrot.lane.b32.xlu0 %v681, 96
        %v695 = vpop.permute.xlu0 %694
        %697 = vst.msk [vmem:[#allocation3] sm:$0xff] %vm314, %v695
        %p698 = scmp.eq.s32.totalorder %s24, 1
        // Predicated region
        $region49: #{lstmc_forward.1} parent=43 // pred_check
          %p699 = pneg %p698
        $region50: #{lstmc_forward.1} parent=43 // pred_check_branch
          %701 = sbr.rel (%p699) target = $region52
        $region51: #{lstmc_forward.1} parent=43 // pred_region
          %v702 = vld [vmem:[%s4] sm:$0x1]
          %s703 = sld [smem:[#allocation5]]
          %v704 = vstv %s703
          %v706 = vsel %vm314, %v702, 0
          %v708 = vsel %vm314, %v690, 0
          %710 = vmatprep.subr.mxu0 0.0
          %711 = vmatpush1.xpose.msra.mxu0 0.0
          %712 = vmatprep.subr.mxu0 0.0
          %713 = vmatpush1.xpose.msra.mxu0 0.0
          %714 = vmatprep.subr.mxu0 0.0
          %715 = vmatpush1.xpose.msra.mxu0 0.0
          %716 = vmatprep.subr.mxu0 0.0
          %717 = vmatpush1.xpose.msra.mxu0 0.0
          %718 = vmatprep.subr.mxu0 0.0
          %719 = vmatpush1.xpose.msra.mxu0 0.0
          %720 = vmatprep.subr.mxu0 0.0
          %721 = vmatpush1.xpose.msra.mxu0 0.0
          %722 = vmatprep.subr.mxu0 0.0
          %723 = vmatpush1.xpose.msra.mxu0 0.0
          %724 = vmatprep.subr.mxu0 0.0
          %725 = vmatpush1.xpose.msra.mxu0 0.0
          %726 = vmatprep.subr.mxu0 0.0
          %727 = vmatpush1.xpose.msra.mxu0 0.0
          %728 = vmatprep.subr.mxu0 0.0
          %729 = vmatpush1.xpose.msra.mxu0 0.0
          %730 = vmatprep.subr.mxu0 0.0
          %731 = vmatpush1.xpose.msra.mxu0 0.0
          %732 = vmatprep.subr.mxu0 0.0
          %733 = vmatpush1.xpose.msra.mxu0 0.0
          %734 = vmatprep.subr.mxu0 0.0
          %735 = vmatpush1.xpose.msra.mxu0 0.0
          %736 = vmatprep.subr.mxu0 0.0
          %737 = vmatpush1.xpose.msra.mxu0 0.0
          %738 = vmatprep.subr.mxu0 0.0
          %739 = vmatpush1.xpose.msra.mxu0 0.0
          %740 = vmatprep.subr.mxu0 0.0
          %741 = vmatpush1.xpose.msra.mxu0 %v708
          %742 = vmatprep.subr.mxu0 0.0
          %743 = vmatpush2.xpose.msra.mxu0 0.0
          %744 = vmatprep.subr.mxu0 0.0
          %745 = vmatpush2.xpose.msra.mxu0 0.0
          %746 = vmatprep.subr.mxu0 0.0
          %747 = vmatpush2.xpose.msra.mxu0 0.0
          %748 = vmatprep.subr.mxu0 0.0
          %749 = vmatpush2.xpose.msra.mxu0 0.0
          %750 = vmatprep.subr.mxu0 0.0
          %751 = vmatpush2.xpose.msra.mxu0 0.0
          %752 = vmatprep.subr.mxu0 0.0
          %753 = vmatpush2.xpose.msra.mxu0 0.0
          %754 = vmatprep.subr.mxu0 0.0
          %755 = vmatpush2.xpose.msra.mxu0 0.0
          %756 = vmatprep.subr.mxu0 0.0
          %757 = vmatpush2.xpose.msra.mxu0 0.0
          %758 = vmatprep.subr.mxu0 0.0
          %759 = vmatpush2.xpose.msra.mxu0 0.0
          %760 = vmatprep.subr.mxu0 0.0
          %761 = vmatpush2.xpose.msra.mxu0 0.0
          %762 = vmatprep.subr.mxu0 0.0
          %763 = vmatpush2.xpose.msra.mxu0 0.0
          %764 = vmatprep.subr.mxu0 0.0
          %765 = vmatpush2.xpose.msra.mxu0 0.0
          %766 = vmatprep.subr.mxu0 0.0
          %767 = vmatpush2.xpose.msra.mxu0 0.0
          %768 = vmatprep.subr.mxu0 0.0
          %769 = vmatpush2.xpose.msra.mxu0 0.0
          %770 = vmatprep.subr.mxu0 0.0
          %771 = vmatpush2.xpose.msra.mxu0 0.0
          %772 = vmatprep.subr.mxu0 0.0
          %773 = vmatpush2.xpose.msra.mxu0 0.0
          %774 = vmatprep.mubr.f32.mxu0 0.0
          %775 = vmatmul.mubr.f32.gmra.mxu0 %v706
          %v776 = vpop.f32.mrf.mxu0
          %v777 = vadd.f32 %v704, %v776
          %v778 = vpop.f32.mrf.mxu0
          %779 = vdwg.mxu0
          %v780 = vxor.u32 %v777, 2147483648
          %v781 = vmul.f32 %v780, 1.442695
          %v782 = vpow.pop %v781
          %v783 = vadd.f32 %v782, 1.0
          %v784 = vrcp.pop %v783
          %v785 = vmul.f32 1.0, %v784
          %vm786 = vcmask 57344
          %787 = vst.msk [vmem:[#allocation6] sm:$0x1] %vm786, %v785
        $region52: #{lstmc_forward.1} parent=43 // pred_fallthru
          _
        // Predicated region
        $region53: #{lstmc_forward.1} parent=43 // pred_check
          %p788 = pneg %p182
        $region54: #{lstmc_forward.1} parent=43 // pred_check_branch
          %790 = sbr.rel (%p788) target = $region56
        $region55: #{lstmc_forward.1} parent=43 // pred_region
          %s792 = ssub.s32 16, 16
          %793 = vsyncadd [#allocation7], %s792
          %s794 = smul.addr %s23, 16
          %s795 = scalar_lea.hbm %s6, %s794
          %s797 = sshll.u32 [#allocation6], 4
          %s798 = int_to_ptr.vmem [resolvable:$true] %s797
          %800 = dma.vmem_to_hbm [thread:$0]  %s798, 16, %s795, [#allocation7]
        $region56: #{lstmc_forward.1} parent=43 // pred_fallthru
          _
        // Predicated region
        $region57: #{lstmc_forward.1} parent=43 // pred_check
          %p801 = pneg %p182
        $region58: #{lstmc_forward.1} parent=43 // pred_check_branch
          %803 = sbr.rel (%p801) target = $region60
        $region59: #{lstmc_forward.1} parent=43 // pred_region
          %804 = dma.done [#allocation7], 16
        $region60: #{lstmc_forward.1} parent=43 // pred_fallthru
          _
      $region44: #{lstmc_forward.1} parent=5 // pred_fallthru
        _
      %p805 = scmp.le.s32.totalorder 2, %s14
      // Predicated region
      $region61: #{lstmc_forward.1} parent=5 // pred_check
        %p806 = pneg %p805
      $region62: #{lstmc_forward.1} parent=5 // pred_check_branch
        %808 = sbr.rel (%p806) target = $region64
      $region63: #{lstmc_forward.1} parent=5 // pred_region
        %s809 = ssub.s32 %s14, 2
      $region64: #{lstmc_forward.1} parent=5 // pred_fallthru
        _
    $region6: #{lstmc_forward.1} parent=1 // loop_footer
      %s18 = sadd.s32 1, %s14
    $region7: #{lstmc_forward.1} parent=1 // loop_footer_branch
      %13 = sbr.rel target = $region3
    $region8: #{lstmc_forward.1} parent=1 // loop_exit
      _
    %810 = vsyncpa [#allocation7], 1
    %s811 = scalar_lea.sflag [#allocation7], 1
    %812 = vsyncpa %s811, 1

</llo_original>
